<compile_context>
chip_gen: v7x
topology: tpu7x:2x2x1
jax: 0.10.0
libtpu: 0.0.40
codegen_flags: <defaults>
</compile_context>

<pallas_src>
import functools

import jax
import jax.numpy as jnp
from jax.experimental import pallas as pl
from jax.experimental.pallas import tpu as pltpu

_LANE = 128
_SUBLANE = 8

# VMEM earmarked for pipeline buffers + scratch: safe on every generation
# (far under v7x's 64 MiB physical, above v5e's 16 MiB default scoped limit,
# which we raise explicitly below).
_VMEM_BUDGET = 36 * 1024 * 1024
_VMEM_LIMIT = 48 * 1024 * 1024


def _round_up(x, m):
    return ((x + m - 1) // m) * m


def _cdiv(a, b):
    return (a + b - 1) // b


def _mlr_kernel(x_ref, wt_ref, b_ref, o_ref, acc_ref, *, num_classes):
    # x_ref: (TB, TK)   wt_ref: (TK, C_pad)   b_ref: (1, C_pad) f32
    # o_ref: (TB, C_pad)   acc_ref: (TB, C_pad) f32 scratch
    k = pl.program_id(1)

    @pl.when(k == 0)
    def _():
        acc_ref[...] = jnp.zeros_like(acc_ref)

    # Partial logits for this feature chunk (MXU matmul, f32 accumulation).
    acc_ref[...] += jnp.dot(x_ref[...], wt_ref[...],
                            preferred_element_type=jnp.float32)

    @pl.when(k == pl.num_programs(1) - 1)
    def _():
        # Bias add; padded class lanes carry a -1e30 bias so they drop out of
        # the softmax normalizer for free (no per-tile iota / where).
        logits = acc_ref[...] + b_ref[...]
        if num_classes > 1:
            m = jnp.max(logits, axis=1, keepdims=True)
            shifted = logits - m
            lse = jnp.log(jnp.sum(jnp.exp(shifted), axis=1, keepdims=True))
            out = shifted - lse
        else:
            # Exact sigmoid (exp runs on the otherwise-idle EUP slot).
            out = 1.0 / (1.0 + jnp.exp(-logits))
        o_ref[...] = out.astype(o_ref.dtype)


def _pick_tiles(B, D, c_pad, x_item, w_item, max_tk=None):
    """Choose (tb, tk, nk) so every pipeline buffer fits the VMEM budget."""

    def buf_bytes(tb, tk, nk):
        w_bufs = 1 if nk == 1 else 2            # resident weight: single buffer
        return (2 * tb * tk * x_item            # x tile, double-buffered
                + w_bufs * tk * c_pad * w_item  # weight tile(s)
                + 2 * tb * c_pad * 4            # output tile (f32), double-buffered
                + 2 * _SUBLANE * c_pad * 4      # bias
                + tb * c_pad * 4)               # f32 accumulator scratch

    # Feature (K) tiling: keep all of D resident unless even a 256-row batch
    # tile would not fit; then halve the K chunk (multiples of 128 lanes).
    tk = D
    if max_tk is not None:
        tk = min(tk, max(_LANE, _round_up(max_tk, _LANE)))
    while tk > 512 and buf_bytes(256, tk, _cdiv(D, tk)) > _VMEM_BUDGET:
        tk = max(512, _round_up(tk // 2, _LANE))
    nk = _cdiv(D, tk)

    # Batch tile: largest candidate that fits the budget and wastes <=~25% of
    # the rows on padding.
    tb = 8
    for cand in (1024, 768, 512, 384, 256, 192, 128, 96, 64, 32, 16, 8):
        if buf_bytes(cand, tk, nk) > _VMEM_BUDGET:
            continue
        waste = _round_up(B, cand) - B
        if 4 * waste <= max(B, 8):
            tb = cand
            break

    # Make sure the "parallel" batch axis has enough grid steps so both v7x
    # TensorCores get work, without dropping below the ~256-row roofline knee.
    while tb > 8 and _cdiv(B, tb) < 2:
        tb = max(8, _round_up(tb // 2, 8))
    while tb > 256 and _cdiv(B, tb) < 4:
        tb = max(256, _round_up(tb // 2, 8))
    return tb, tk, nk


def multinomial_logistic_regression(x, weight, bias, num_classes, *,
                                    input_dtype=jnp.bfloat16,
                                    out_dtype=jnp.float32,
                                    max_tk=None):
    """Forward pass of MultinomialLogisticRegression.

    x:      (B, H, W) with H*W == weight.shape[1]  (nn.Flatten then nn.Linear)
    weight: (C, D)   PyTorch nn.Linear layout
    bias:   (C,)
    input_dtype: dtype for the streamed x / weight operands (default bf16 —
                 the kernel is HBM-bound on x; accumulation & softmax are f32).
    out_dtype:   output dtype (f32 default for parity with the PyTorch module).
    Returns (B, C) in out_dtype (log-softmax if num_classes > 1, else sigmoid).
    """
    B = x.shape[0]
    C, D = weight.shape
    assert C == num_classes

    # --- wrapper-side layout prep (one-time; XLA fuses it) -------------------
    x_flat = x.reshape(B, D).astype(input_dtype)     # nn.Flatten()
    w_t = weight.T.astype(input_dtype)               # (D, C): no in-kernel transpose

    x_item = jnp.dtype(input_dtype).itemsize
    c_pad = _round_up(max(C, _LANE), _LANE)          # lane-dense stores / reductions
    tb, tk, nk = _pick_tiles(B, D, c_pad, x_item, x_item, max_tk=max_tk)

    # Pad the class dim to the 128-lane width.  Padded bias lanes get -1e30 so
    # padded classes fall out of the log-softmax with zero in-kernel masking.
    pad_val = -1e30 if num_classes > 1 else 0.0
    w_t = jnp.pad(w_t, ((0, 0), (0, c_pad - C)))
    bias2d = jnp.pad(bias.astype(jnp.float32).reshape(1, C),
                     ((0, 0), (0, c_pad - C)), constant_values=pad_val)

    # Pad batch to a tile multiple and (for the K-tiled path) the feature dim to
    # a tk multiple; zero rows of W / zero cols of x contribute nothing.
    b_pad = _round_up(B, tb)
    d_pad = tk * nk
    if b_pad != B or d_pad != D:
        x_flat = jnp.pad(x_flat, ((0, b_pad - B), (0, d_pad - D)))
    if d_pad != D:
        w_t = jnp.pad(w_t, ((0, d_pad - D), (0, 0)))

    kernel = functools.partial(_mlr_kernel, num_classes=num_classes)

    # Weight is grid-resident when nk == 1: single-buffer it (nothing to
    # prefetch) and spend the VMEM on a larger batch tile instead.
    if nk == 1:
        w_spec = pl.BlockSpec((tk, c_pad), lambda i, k: (k, 0),
                              pipeline_mode=pl.Buffered(1))
    else:
        w_spec = pl.BlockSpec((tk, c_pad), lambda i, k: (k, 0))
    b_spec = pl.BlockSpec((1, c_pad), lambda i, k: (0, 0),
                          pipeline_mode=pl.Buffered(1))

    out = pl.pallas_call(
        kernel,
        out_shape=jax.ShapeDtypeStruct((b_pad, c_pad), out_dtype),
        grid_spec=pltpu.PrefetchScalarGridSpec(
            num_scalar_prefetch=0,
            grid=(b_pad // tb, nk),                       # (batch tiles, K chunks)
            in_specs=[
                pl.BlockSpec((tb, tk), lambda i, k: (i, k)),   # x (streamed)
                w_spec,                                        # weight
                b_spec,                                        # bias
            ],
            out_specs=pl.BlockSpec((tb, c_pad), lambda i, k: (i, 0)),
            scratch_shapes=[pltpu.VMEM((tb, c_pad), jnp.float32)],
        ),
        compiler_params=pltpu.CompilerParams(
            dimension_semantics=("parallel", "arbitrary"),
            vmem_limit_bytes=_VMEM_LIMIT,
        ),
    )(x_flat, w_t, bias2d)

    return out[:B, :C]


if __name__ == "__main__":
    input_dim = 16
    num_classes = 10
    batch = 8
    D = input_dim * input_dim

    key = jax.random.PRNGKey(0)
    kx, kw, kb = jax.random.split(key, 3)
    x = jax.random.normal(kx, (batch, input_dim, input_dim), dtype=jnp.float32)

    # _init_weights_zero: the module's Linear weight and bias start at zero.
    weight0 = jnp.zeros((num_classes, D), dtype=jnp.float32)
    bias0 = jnp.zeros((num_classes,), dtype=jnp.float32)

    out = jax.block_until_ready(
        multinomial_logistic_regression(x, weight0, bias0, num_classes))
    ref = jax.nn.log_softmax(x.reshape(batch, D) @ weight0.T + bias0, axis=1)
    assert out.shape == (batch, num_classes)
    assert jnp.allclose(out, ref, atol=1e-5), "mismatch vs reference (zero init)"

    # Non-trivial weights: exact f32 streaming path (tight tolerance).
    weight_r = 0.1 * jax.random.normal(kw, (num_classes, D), dtype=jnp.float32)
    bias_r = 0.1 * jax.random.normal(kb, (num_classes,), dtype=jnp.float32)
    ref_r = jax.nn.log_softmax(x.reshape(batch, D) @ weight_r.T + bias_r, axis=1)

    out_f32 = jax.block_until_ready(multinomial_logistic_regression(
        x, weight_r, bias_r, num_classes, input_dtype=jnp.float32))
    assert jnp.allclose(out_f32, ref_r, atol=1e-4), "mismatch (f32 path)"

    # Default bf16 streaming path (f32 accumulation; looser tolerance).
    out_bf16 = jax.block_until_ready(multinomial_logistic_regression(
        x, weight_r, bias_r, num_classes))
    assert jnp.allclose(out_bf16, ref_r, atol=3e-2), "mismatch (bf16 path)"

    # K-tiled path: feature dim split across the trailing "arbitrary" grid axis.
    out_kt = jax.block_until_ready(multinomial_logistic_regression(
        x, weight_r, bias_r, num_classes, input_dtype=jnp.float32, max_tk=128))
    assert jnp.allclose(out_kt, ref_r, atol=1e-4), "mismatch (K-tiled path)"

    # num_classes == 1 -> sigmoid branch.
    weight1 = 0.1 * jax.random.normal(kw, (1, D), dtype=jnp.float32)
    bias1 = 0.1 * jax.random.normal(kb, (1,), dtype=jnp.float32)
    out_sig = jax.block_until_ready(multinomial_logistic_regression(
        x, weight1, bias1, 1, input_dtype=jnp.float32))
    ref_sig = jax.nn.sigmoid(x.reshape(batch, D) @ weight1.T + bias1)
    assert jnp.allclose(out_sig, ref_sig, atol=1e-4), "mismatch (sigmoid branch)"

    print("KERNEL_OK")
</pallas_src>

<mosaic_0001>
module attributes {stable_mosaic.version = 11 : i64} {
  func.func @_mlr_kernel(%arg0: i32, %arg1: i32, %arg2: memref<8x256xbf16, #tpu.memory_space<vmem>>, %arg3: memref<256x128xbf16, #tpu.memory_space<vmem>>, %arg4: memref<1x128xf32, #tpu.memory_space<vmem>>, %arg5: memref<8x128xf32, #tpu.memory_space<vmem>>, %arg6: memref<8x128xf32, #tpu.memory_space<vmem>>) attributes {dimension_semantics = [#tpu.dimension_semantics<parallel>, #tpu.dimension_semantics<arbitrary>], iteration_bounds = array<i64: 1, 1>, scalar_prefetch = 0 : i64, scratch_operands = 1 : i64, tpu.core_type = #tpu.core_type<tc>, window_params = [{transform_indices = @transform_0, window_bounds = array<i64: 8, 256>}, {pipeline_mode = #tpu.pipeline_mode<synchronous>, transform_indices = @transform_1, window_bounds = array<i64: 256, 128>}, {pipeline_mode = #tpu.pipeline_mode<synchronous>, transform_indices = @transform_2, window_bounds = array<i64: 1, 128>}, {transform_indices = @transform_3, window_bounds = array<i64: 8, 128>}]} {
    %c0_i32 = arith.constant 0 : i32
    %0 = arith.cmpi eq, %arg1, %c0_i32 : i32
    %1 = arith.extui %0 : i1 to i32
    %c0_i32_0 = arith.constant 0 : i32
    %2 = arith.cmpi ne, %1, %c0_i32_0 : i32
    scf.if %2 {
      %cst_10 = arith.constant 0.000000e+00 : f32
      %12 = vector.broadcast %cst_10 : f32 to vector<8x128xf32>
      %c0_11 = arith.constant 0 : index
      %c0_12 = arith.constant 0 : index
      %13 = vector.load %arg6[%c0_11, %c0_12] : memref<8x128xf32, #tpu.memory_space<vmem>>, vector<8x128xf32>
      tpu.vector_store %arg6[%c0_11, %c0_12], %12 {strides = array<i32>} : memref<8x128xf32, #tpu.memory_space<vmem>>, vector<8x128xf32>,
    } else {
    }
    %c0 = arith.constant 0 : index
    %c0_1 = arith.constant 0 : index
    %3 = vector.load %arg6[%c0, %c0_1] : memref<8x128xf32, #tpu.memory_space<vmem>>, vector<8x128xf32>
    %c0_2 = arith.constant 0 : index
    %c0_3 = arith.constant 0 : index
    %4 = vector.load %arg2[%c0_2, %c0_3] : memref<8x256xbf16, #tpu.memory_space<vmem>>, vector<8x256xbf16>
    %c0_4 = arith.constant 0 : index
    %c0_5 = arith.constant 0 : index
    %5 = vector.load %arg3[%c0_4, %c0_5] : memref<256x128xbf16, #tpu.memory_space<vmem>>, vector<256x128xbf16>
    %cst = arith.constant dense<0.000000e+00> : vector<8x128xf32>
    %6 = tpu.matmul %4, %5, %cst {dimension_numbers = #tpu.dot_dimension_numbers<[1], [0], [0], [1], [0, 0, 1, 1], [], []>} : vector<8x256xbf16>, vector<256x128xbf16>, vector<8x128xf32> -> vector<8x128xf32>
    %7 = arith.addf %3, %6 : vector<8x128xf32>
    %c0_6 = arith.constant 0 : index
    %c0_7 = arith.constant 0 : index
    %8 = vector.load %arg6[%c0_6, %c0_7] : memref<8x128xf32, #tpu.memory_space<vmem>>, vector<8x128xf32>
    tpu.vector_store %arg6[%c0_6, %c0_7], %7 {strides = array<i32>} : memref<8x128xf32, #tpu.memory_space<vmem>>, vector<8x128xf32>,
    %c0_i32_8 = arith.constant 0 : i32
    %9 = arith.cmpi eq, %arg1, %c0_i32_8 : i32
    %10 = arith.extui %9 : i1 to i32
    %c0_i32_9 = arith.constant 0 : i32
    %11 = arith.cmpi ne, %10, %c0_i32_9 : i32
    scf.if %11 {
      %c0_10 = arith.constant 0 : index
      %c0_11 = arith.constant 0 : index
      %12 = vector.load %arg6[%c0_10, %c0_11] : memref<8x128xf32, #tpu.memory_space<vmem>>, vector<8x128xf32>
      %c0_12 = arith.constant 0 : index
      %c0_13 = arith.constant 0 : index
      %13 = vector.load %arg4[%c0_12, %c0_13] : memref<1x128xf32, #tpu.memory_space<vmem>>, vector<1x128xf32>
      %14 = vector.broadcast %13 : vector<1x128xf32> to vector<8x128xf32>
      %15 = arith.addf %12, %14 : vector<8x128xf32>
      %cst_14 = arith.constant dense<0xFF800000> : vector<8xf32>
      %16 = vector.multi_reduction <maximumf>, %15, %cst_14 [1] : vector<8x128xf32> to vector<8xf32>
      %17 = vector.shape_cast %16 : vector<8xf32> to vector<8x1xf32>
      %18 = vector.broadcast %17 : vector<8x1xf32> to vector<8x128xf32>
      %19 = arith.subf %15, %18 : vector<8x128xf32>
      %20 = math.exp %19 : vector<8x128xf32>
      %cst_15 = arith.constant dense<0.000000e+00> : vector<8xf32>
      %21 = vector.multi_reduction <add>, %20, %cst_15 [1] : vector<8x128xf32> to vector<8xf32>
      %22 = vector.shape_cast %21 : vector<8xf32> to vector<8x1xf32>
      %23 = math.log %22 : vector<8x1xf32>
      %24 = vector.broadcast %23 : vector<8x1xf32> to vector<8x128xf32>
      %25 = arith.subf %19, %24 : vector<8x128xf32>
      %c0_16 = arith.constant 0 : index
      %c0_17 = arith.constant 0 : index
      %26 = vector.load %arg5[%c0_16, %c0_17] : memref<8x128xf32, #tpu.memory_space<vmem>>, vector<8x128xf32>
      tpu.vector_store %arg5[%c0_16, %c0_17], %25 {strides = array<i32>} : memref<8x128xf32, #tpu.memory_space<vmem>>, vector<8x128xf32>,
    } else {
    }
    return
  }
  func.func @transform_0(%arg0: i32, %arg1: i32) -> (i32, i32) {
    %c0_i32 = arith.constant 0 : i32
    return %arg0, %arg1 : i32, i32
  }
  func.func @transform_1(%arg0: i32, %arg1: i32) -> (i32, i32) {
    %c0_i32 = arith.constant 0 : i32
    %c0_i32_0 = arith.constant 0 : i32
    return %arg1, %c0_i32 : i32, i32
  }
  func.func @transform_2(%arg0: i32, %arg1: i32) -> (i32, i32) {
    %c0_i32 = arith.constant 0 : i32
    %c0_i32_0 = arith.constant 0 : i32
    %c0_i32_1 = arith.constant 0 : i32
    return %c0_i32, %c0_i32_0 : i32, i32
  }
  func.func @transform_3(%arg0: i32, %arg1: i32) -> (i32, i32) {
    %c0_i32 = arith.constant 0 : i32
    %c0_i32_0 = arith.constant 0 : i32
    return %arg0, %c0_i32 : i32, i32
  }
}

</mosaic_0001>

<llo_original>
// kernel: tpu_custom_call.1
$region0: #{tpu_custom_call.1}
  #allocation0 [shape = 'u32[]', space=smem, size = 0x4, offset = 0x4, fixed_abs, tag = 'smem constant byte address 0x4 - core index']
  #allocation1 [shape = 'u32[144,128]{1,0:T(1,128)}', space=vmem, size = 0x12000, scoped, tag = 'internal scratch']
  #allocation2 [shape = 'f32[8,128]{1,0:T(8,128)}', space=vmem, size = 0x1000, scoped, tag = 'scratch operand']
  %s0 = inlined_call_operand.hbm [shape: bf16[8,256], index: 0, kind: input, shape index: {}]
  %s1 = inlined_call_operand.hbm [shape: bf16[256,128], index: 1, kind: input, shape index: {}]
  %s2 = inlined_call_operand.vmem [shape: f32[1,128], index: 2, kind: input, shape index: {}]
  %s3 = inlined_call_operand.hbm [shape: f32[8,128], index: 3, kind: output, shape index: {}]
  %s4 = sld [smem:[#allocation0]]
  $region38: #{tpu_custom_call.1} parent=0
    _
  %s6 = ssub.s32 1, %s4
  %s7 = scalar_select 0, %s6, %s4
  $region1: #{tpu_custom_call.1} parent=0
    #allocation3 [shape = 'u8[4096]{0}', space=vmem, size = 0x1000, scoped, tag = 'input window, operand 0, single buffered']
    #allocation4 [shape = 's32[1]{0}', space=sflag, size = 0x4, scoped, tag = 'scoped memory for tpu_custom_call.1']
    #allocation5 [shape = 's32[1]{0}', space=sflag, size = 0x4, scoped, tag = 'scoped memory for tpu_custom_call.1']
    #allocation6 [shape = 'u8[65536]{0}', space=vmem, size = 0x10000, scoped, tag = 'input window, operand 1, single buffered']
    #allocation7 [shape = 's32[1]{0}', space=sflag, size = 0x4, scoped, tag = 'scoped memory for tpu_custom_call.1']
    #allocation8 [shape = 'u8[4096]{0}', space=vmem, size = 0x1000, scoped, tag = 'output window, operand 0, single buffered']
    %8 = vsyncpa [#allocation4], 0
    %9 = vsyncpa [#allocation7], 0
    %10 = vsyncpa [#allocation5], 0
    // Predicated region
    $region2: #{tpu_custom_call.1} parent=1 // pred_check
      _
    $region3: #{tpu_custom_call.1} parent=1 // pred_check_branch
      %12 = sbr.rel (0) target = $region5
    $region4: #{tpu_custom_call.1} parent=1 // pred_region
      %s14 = ssub.s32 128, 128
      %15 = vsyncadd [#allocation4], %s14
      %s17 = sshll.u32 [#allocation3], 4
      %s18 = int_to_ptr.vmem [resolvable:$true] %s17
      %20 = dma.hbm_to_vmem [thread:$0]  %s0, 128, %s18, [#allocation4]
    $region5: #{tpu_custom_call.1} parent=1 // pred_fallthru
      _
    // Predicated region
    $region6: #{tpu_custom_call.1} parent=1 // pred_check
      _
    $region7: #{tpu_custom_call.1} parent=1 // pred_check_branch
      %22 = sbr.rel (0) target = $region9
    $region8: #{tpu_custom_call.1} parent=1 // pred_region
      %s24 = ssub.s32 2048, 2048
      %25 = vsyncadd [#allocation7], %s24
      %s26 = sshll.u32 [#allocation6], 4
      %s27 = int_to_ptr.vmem [resolvable:$true] %s26
      %32 = dma.hbm_to_vmem [thread:$0]  %s1, 2048, %s27, [#allocation7], 64, 64, 4
    $region9: #{tpu_custom_call.1} parent=1 // pred_fallthru
      _
    // Predicated region
    $region10: #{tpu_custom_call.1} parent=1 // pred_check
      _
    $region11: #{tpu_custom_call.1} parent=1 // pred_check_branch
      %34 = sbr.rel (0) target = $region13
    $region12: #{tpu_custom_call.1} parent=1 // pred_region
      _
    $region13: #{tpu_custom_call.1} parent=1 // pred_fallthru
      _
    // Predicated region
    $region14: #{tpu_custom_call.1} parent=1 // pred_check
      _
    $region15: #{tpu_custom_call.1} parent=1 // pred_check_branch
      %36 = sbr.rel (0) target = $region17
    $region16: #{tpu_custom_call.1} parent=1 // pred_region
      %37 = dma.done [#allocation4], 128
    $region17: #{tpu_custom_call.1} parent=1 // pred_fallthru
      _
    // Predicated region
    $region18: #{tpu_custom_call.1} parent=1 // pred_check
      _
    $region19: #{tpu_custom_call.1} parent=1 // pred_check_branch
      %39 = sbr.rel (0) target = $region21
    $region20: #{tpu_custom_call.1} parent=1 // pred_region
      %40 = dma.done [#allocation7], 2048
    $region21: #{tpu_custom_call.1} parent=1 // pred_fallthru
      _
    %p42 = scmp.eq.s32.totalorder 0, 0
    // Predicated region
    $region22: #{tpu_custom_call.1} parent=1 // pred_check
      %p43 = pneg %p42
    $region23: #{tpu_custom_call.1} parent=1 // pred_check_branch
      %45 = sbr.rel (%p43) target = $region25
    $region24: #{tpu_custom_call.1} parent=1 // pred_region
      %46 = vst [vmem:[#allocation2] sm:$0xff] 0.0
    $region25: #{tpu_custom_call.1} parent=1 // pred_fallthru
      _
    %v47 = vld [vmem:[#allocation2] sm:$0xff]
    %v48 = vld [vmem:[#allocation3] sm:$0xff]
    %v49 = vld [vmem:[#allocation6] sm:$0xf]
    %v50 = vld [vmem:[#allocation6 + $0x4] sm:$0xf]
    %v51 = vld [vmem:[#allocation6 + $0x8] sm:$0xf]
    %v52 = vld [vmem:[#allocation6 + $0xc] sm:$0xf]
    %v53 = vld [vmem:[#allocation6 + $0x10] sm:$0xf]
    %v54 = vld [vmem:[#allocation6 + $0x14] sm:$0xf]
    %v55 = vld [vmem:[#allocation6 + $0x18] sm:$0xf]
    %v56 = vld [vmem:[#allocation6 + $0x1c] sm:$0xf]
    %v57 = vld [vmem:[#allocation6 + $0x20] sm:$0xf]
    %v58 = vld [vmem:[#allocation6 + $0x24] sm:$0xf]
    %v59 = vld [vmem:[#allocation6 + $0x28] sm:$0xf]
    %v60 = vld [vmem:[#allocation6 + $0x2c] sm:$0xf]
    %v61 = vld [vmem:[#allocation6 + $0x30] sm:$0xf]
    %v62 = vld [vmem:[#allocation6 + $0x34] sm:$0xf]
    %v63 = vld [vmem:[#allocation6 + $0x38] sm:$0xf]
    %v64 = vld [vmem:[#allocation6 + $0x3c] sm:$0xf]
    %v65 = vld [vmem:[#allocation6 + $0x40] sm:$0xf]
    %v66 = vld [vmem:[#allocation6 + $0x44] sm:$0xf]
    %v67 = vld [vmem:[#allocation6 + $0x48] sm:$0xf]
    %v68 = vld [vmem:[#allocation6 + $0x4c] sm:$0xf]
    %v69 = vld [vmem:[#allocation6 + $0x50] sm:$0xf]
    %v70 = vld [vmem:[#allocation6 + $0x54] sm:$0xf]
    %v71 = vld [vmem:[#allocation6 + $0x58] sm:$0xf]
    %v72 = vld [vmem:[#allocation6 + $0x5c] sm:$0xf]
    %v73 = vld [vmem:[#allocation6 + $0x60] sm:$0xf]
    %v74 = vld [vmem:[#allocation6 + $0x64] sm:$0xf]
    %v75 = vld [vmem:[#allocation6 + $0x68] sm:$0xf]
    %v76 = vld [vmem:[#allocation6 + $0x6c] sm:$0xf]
    %v77 = vld [vmem:[#allocation6 + $0x70] sm:$0xf]
    %v78 = vld [vmem:[#allocation6 + $0x74] sm:$0xf]
    %v79 = vld [vmem:[#allocation6 + $0x78] sm:$0xf]
    %v80 = vld [vmem:[#allocation6 + $0x7c] sm:$0xf]
    %v82 = vunpack.c.l.b16 %v48
    %v83 = vunpack.c.h.b16 %v48
    %v84 = vpack.c.b16 %v82, %v82
    %v85 = vpack.c.b16 %v83, %v83
    %v120 = vunpack.c.l.b16 %v49
    %v121 = vunpack.c.l.b16 %v50
    %v122 = vunpack.c.l.b16 %v51
    %v123 = vunpack.c.l.b16 %v52
    %v124 = vunpack.c.l.b16 %v53
    %v125 = vunpack.c.l.b16 %v54
    %v126 = vunpack.c.l.b16 %v55
    %v127 = vunpack.c.l.b16 %v56
    %v128 = vunpack.c.l.b16 %v57
    %v129 = vunpack.c.l.b16 %v58
    %v130 = vunpack.c.l.b16 %v59
    %v131 = vunpack.c.l.b16 %v60
    %v132 = vunpack.c.l.b16 %v61
    %v133 = vunpack.c.l.b16 %v62
    %v134 = vunpack.c.l.b16 %v63
    %v135 = vunpack.c.l.b16 %v64
    %v136 = vunpack.c.l.b16 %v65
    %v137 = vunpack.c.l.b16 %v66
    %v138 = vunpack.c.l.b16 %v67
    %v139 = vunpack.c.l.b16 %v68
    %v140 = vunpack.c.l.b16 %v69
    %v141 = vunpack.c.l.b16 %v70
    %v142 = vunpack.c.l.b16 %v71
    %v143 = vunpack.c.l.b16 %v72
    %v144 = vunpack.c.l.b16 %v73
    %v145 = vunpack.c.l.b16 %v74
    %v146 = vunpack.c.l.b16 %v75
    %v147 = vunpack.c.l.b16 %v76
    %v148 = vunpack.c.l.b16 %v77
    %v149 = vunpack.c.l.b16 %v78
    %v150 = vunpack.c.l.b16 %v79
    %v151 = vunpack.c.l.b16 %v80
    %v152 = vpack.c.b16 %v121, %v120
    %v153 = vpack.c.b16 %v123, %v122
    %v154 = vpack.c.b16 %v125, %v124
    %v155 = vpack.c.b16 %v127, %v126
    %v156 = vpack.c.b16 %v129, %v128
    %v157 = vpack.c.b16 %v131, %v130
    %v158 = vpack.c.b16 %v133, %v132
    %v159 = vpack.c.b16 %v135, %v134
    %v160 = vpack.c.b16 %v137, %v136
    %v161 = vpack.c.b16 %v139, %v138
    %v162 = vpack.c.b16 %v141, %v140
    %v163 = vpack.c.b16 %v143, %v142
    %v164 = vpack.c.b16 %v145, %v144
    %v165 = vpack.c.b16 %v147, %v146
    %v166 = vpack.c.b16 %v149, %v148
    %v167 = vpack.c.b16 %v151, %v150
    %184 = vmatprep.subr.bf16.mxu0 0
    %185 = vmatpush1.bf16.msra.mxu0 %v152
    %186 = vmatprep.subr.bf16.mxu0 0
    %187 = vmatpush1.bf16.msra.mxu0 %v153
    %188 = vmatprep.subr.bf16.mxu0 0
    %189 = vmatpush1.bf16.msra.mxu0 %v154
    %190 = vmatprep.subr.bf16.mxu0 0
    %191 = vmatpush1.bf16.msra.mxu0 %v155
    %192 = vmatprep.subr.bf16.mxu0 0
    %193 = vmatpush1.bf16.msra.mxu0 %v156
    %194 = vmatprep.subr.bf16.mxu0 0
    %195 = vmatpush1.bf16.msra.mxu0 %v157
    %196 = vmatprep.subr.bf16.mxu0 0
    %197 = vmatpush1.bf16.msra.mxu0 %v158
    %198 = vmatprep.subr.bf16.mxu0 0
    %199 = vmatpush1.bf16.msra.mxu0 %v159
    %200 = vmatprep.subr.bf16.mxu0 0
    %201 = vmatpush1.bf16.msra.mxu0 %v160
    %202 = vmatprep.subr.bf16.mxu0 0
    %203 = vmatpush1.bf16.msra.mxu0 %v161
    %204 = vmatprep.subr.bf16.mxu0 0
    %205 = vmatpush1.bf16.msra.mxu0 %v162
    %206 = vmatprep.subr.bf16.mxu0 0
    %207 = vmatpush1.bf16.msra.mxu0 %v163
    %208 = vmatprep.subr.bf16.mxu0 0
    %209 = vmatpush1.bf16.msra.mxu0 %v164
    %210 = vmatprep.subr.bf16.mxu0 0
    %211 = vmatpush1.bf16.msra.mxu0 %v165
    %212 = vmatprep.subr.bf16.mxu0 0
    %213 = vmatpush1.bf16.msra.mxu0 %v166
    %214 = vmatprep.subr.bf16.mxu0 0
    %215 = vmatpush1.bf16.msra.mxu0 %v167
    %216 = vmatprep.mubr.bf16.mxu0 %v85
    %217 = vmatmul.mubr.bf16.gmra.mrb[0].mxu0 %v84
    %v218 = vpop.f32.mrb[0].mxu0
    %v219 = vadd.f32 0.0, %v218
    %v220 = vpop.f32.mrb[0].mxu0
    %v221 = vpop.f32.mrb[0].mxu0
    %v222 = vpop.f32.mrb[0].mxu0
    %223 = vdwg.mxu0
    %v224 = vadd.f32 %v47, %v219
    %225 = vst [vmem:[#allocation2] sm:$0xff] %v224
    // Predicated region
    $region26: #{tpu_custom_call.1} parent=1 // pred_check
      %p226 = pneg %p42
    $region27: #{tpu_custom_call.1} parent=1 // pred_check_branch
      %228 = sbr.rel (%p226) target = $region29
    $region28: #{tpu_custom_call.1} parent=1 // pred_region
      %v229 = vld [vmem:[#allocation2] sm:$0xff]
      %v230 = vld [vmem:[%s2] sm:$0x1]
      %v232 = vlaneseq
      %v233 = vshrl.u32 %v232, 7
      %v234 = vsub.s32 0, %v233
      %v235 = vrot.slane %v230, %v234
      %v237 = vadd.f32 %v229, %v235
      %238 = vmax.xlane.f32.xlu0 %v237
      %v239 = vpop.xlane.xlu0 %238
      %v240 = vsub.f32 %v237, %v239
      %v241 = vmul.f32 %v240, 1.442695
      %v242 = vpow.pop %v241
      %243 = vadd.xlane.f32.xlu0 %v242
      %v244 = vpop.xlane.xlu0 %243
      %v245 = vlog2.pop %v244
      %v246 = vmul.f32 %v245, 0.6931472
      %v247 = vsub.f32 %v240, %v246
      %248 = vst [vmem:[#allocation8] sm:$0xff] %v247
    $region29: #{tpu_custom_call.1} parent=1 // pred_fallthru
      _
    // Predicated region
    $region30: #{tpu_custom_call.1} parent=1 // pred_check
      _
    $region31: #{tpu_custom_call.1} parent=1 // pred_check_branch
      %250 = sbr.rel (0) target = $region33
    $region32: #{tpu_custom_call.1} parent=1 // pred_region
      %s252 = ssub.s32 128, 128
      %253 = vsyncadd [#allocation5], %s252
      %s255 = sshll.u32 [#allocation8], 4
      %s256 = int_to_ptr.vmem [resolvable:$true] %s255
      %258 = dma.vmem_to_hbm [thread:$0]  %s256, 128, %s3, [#allocation5]
    $region33: #{tpu_custom_call.1} parent=1 // pred_fallthru
      _
    // Predicated region
    $region34: #{tpu_custom_call.1} parent=1 // pred_check
      _
    $region35: #{tpu_custom_call.1} parent=1 // pred_check_branch
      %260 = sbr.rel (0) target = $region37
    $region36: #{tpu_custom_call.1} parent=1 // pred_region
      %261 = dma.done [#allocation5], 128
    $region37: #{tpu_custom_call.1} parent=1 // pred_fallthru
      _
    %262 = vsyncpa [#allocation4], 1
    %263 = vsyncpa [#allocation7], 1
    %264 = vsyncpa [#allocation5], 1

</llo_original>
